<compile_context>
chip_gen: v7x
topology: tpu7x:2x2x1
jax: 0.10.0
libtpu: 0.0.40
codegen_flags: <defaults>
</compile_context>

<pallas_src>
import jax
import jax.numpy as jnp
from jax.experimental import pallas as pl
from jax.experimental.pallas import tpu as pltpu


# ------------------------------ Pallas kernels ------------------------------

def _wx_kernel(x_ref, w_ref, o_ref):
    # o = W @ x   (lane-dense: lanes = B*3 columns of x / o)
    acc = jnp.dot(w_ref[...], x_ref[...].astype(w_ref.dtype),
                  preferred_element_type=jnp.float32)
    o_ref[...] = acc.astype(o_ref.dtype)


def _wx_residual_kernel(x_ref, w_ref, o_ref):
    # o = x + W @ x   (num_vec_in == num_vec_out, 'final' zero-init weight)
    x = x_ref[...]
    acc = jnp.dot(w_ref[...], x.astype(w_ref.dtype),
                  preferred_element_type=jnp.float32)
    o_ref[...] = (x.astype(jnp.float32) + acc).astype(o_ref.dtype)


def _xw_kernel(x_ref, wt_ref, o_ref):
    # o = x @ W^T
    acc = jnp.dot(x_ref[...].astype(wt_ref.dtype), wt_ref[...],
                  preferred_element_type=jnp.float32)
    o_ref[...] = acc.astype(o_ref.dtype)


def _xw_residual_kernel(x_ref, wt_ref, o_ref):
    # o = x + x @ W^T
    x = x_ref[...]
    acc = jnp.dot(x.astype(wt_ref.dtype), wt_ref[...],
                  preferred_element_type=jnp.float32)
    o_ref[...] = (x.astype(jnp.float32) + acc).astype(o_ref.dtype)


# ----------------------------- pallas_call glue ------------------------------

_VMEM_LIMIT = 32 * 1024 * 1024  # explicit scoped-VMEM cap; safe on v5e/v6e/v7x


def _compiler_params():
    return pltpu.CompilerParams(
        dimension_semantics=("parallel",),
        vmem_limit_bytes=_VMEM_LIMIT,
    )


def _cost(m, k, n, x, w, out_dtype, residual):
    flops = 2 * m * k * n + (m * n if residual else 0)
    bytes_accessed = (x.size * x.dtype.itemsize
                      + w.size * w.dtype.itemsize
                      + m * n * jnp.dtype(out_dtype).itemsize)
    return pl.CostEstimate(flops=flops, transcendentals=0,
                           bytes_accessed=bytes_accessed)


def _wx_matmul(w, x, *, residual, out_dtype, tn_max=512):
    """out = W @ x (+ x).  W: (M, K) resident; x: (K, N), tiled along lanes."""
    M, K = w.shape
    Kx, N = x.shape
    assert K == Kx
    tn = N if N <= tn_max else tn_max          # tn_max multiple of 128 and 256
    grid = (pl.cdiv(N, tn),)
    kernel = _wx_residual_kernel if residual else _wx_kernel
    return pl.pallas_call(
        kernel,
        grid=grid,
        in_specs=[pl.BlockSpec((K, tn), lambda i: (0, i)),    # x (lane-tiled)
                  pl.BlockSpec((M, K), lambda i: (0, 0))],    # W (resident)
        out_specs=pl.BlockSpec((M, tn), lambda i: (0, i)),
        out_shape=jax.ShapeDtypeStruct((M, N), out_dtype),
        compiler_params=_compiler_params(),
        cost_estimate=_cost(M, K, N, x, w, out_dtype, residual),
    )(x, w)


def _xw_matmul(x, wt, *, residual, out_dtype, tm_max=256):
    """out = x @ W^T (+ x).  x: (M, K), row-tiled; W^T: (K, N) resident."""
    M, K = x.shape
    Kw, N = wt.shape
    assert K == Kw
    tm = M if M <= tm_max else tm_max          # tm_max multiple of 8/128/256
    grid = (pl.cdiv(M, tm),)
    kernel = _xw_residual_kernel if residual else _xw_kernel
    return pl.pallas_call(
        kernel,
        grid=grid,
        in_specs=[pl.BlockSpec((tm, K), lambda i: (i, 0)),    # x (row-tiled)
                  pl.BlockSpec((K, N), lambda i: (0, 0))],    # W^T (resident)
        out_specs=pl.BlockSpec((tm, N), lambda i: (i, 0)),
        out_shape=jax.ShapeDtypeStruct((M, N), out_dtype),
        compiler_params=_compiler_params(),
        cost_estimate=_cost(M, K, N, x, wt, out_dtype, residual),
    )(x, wt)


# --------------------------- parameter init (glue) ---------------------------

def _glorot_uniform(key, fan_out, fan_in, dtype):
    # torch.nn.init.xavier_uniform_ on weight of shape (fan_out, fan_in)
    limit = (6.0 / (fan_in + fan_out)) ** 0.5
    w = jax.random.uniform(key, (fan_out, fan_in), dtype=jnp.float32,
                           minval=-limit, maxval=limit)
    return w.astype(dtype)


class VecLinearPallas:
    """Mirrors VecLinear(num_vec_in, num_vec_out, type) forward semantics."""

    def __init__(self, num_vec_in, num_vec_out, type, key,
                 compute_dtype=jnp.bfloat16):
        self.num_vec_in = num_vec_in
        self.num_vec_out = num_vec_out
        self.type = type
        self.residual = num_vec_in == num_vec_out
        if type == "geometric":
            # GeoVecLinear: Linear(num_vec_in, num_vec_out, bias=False),
            # 'final' (zero) init when in == out.
            if self.residual:
                self.W = jnp.zeros((num_vec_out, num_vec_in), compute_dtype)
            else:
                self.W = _glorot_uniform(key, num_vec_out, num_vec_in,
                                         compute_dtype)
        elif type == "vanilla":
            # VanVecLinear: Linear(num_vec_in*3, num_vec_out*3, bias=False).
            if self.residual:
                self.W = jnp.zeros((num_vec_out * 3, num_vec_in * 3),
                                   compute_dtype)
            else:
                self.W = _glorot_uniform(key, num_vec_out * 3, num_vec_in * 3,
                                         compute_dtype)
            self.Wt = jnp.asarray(self.W.T)   # transposed ONCE here, not per call
        else:
            raise ValueError("Invalid method.")

    def __call__(self, vec):
        # vec: (B, num_vec_in, 3) float32
        B = vec.shape[0]
        if self.type == "geometric":
            # Lane-dense layout: X[i, b*3 + d] = vec[b, i, d];  O = W @ X
            x = jnp.transpose(vec, (1, 0, 2)).reshape(self.num_vec_in, B * 3)
            out2d = _wx_matmul(self.W, x, residual=self.residual,
                               out_dtype=vec.dtype)
            return jnp.transpose(out2d.reshape(self.num_vec_out, B, 3),
                                 (1, 0, 2))
        else:  # vanilla
            x = vec.reshape(B, self.num_vec_in * 3)
            out2d = _xw_matmul(x, self.Wt, residual=self.residual,
                               out_dtype=vec.dtype)
            return out2d.reshape(B, self.num_vec_out, 3)


# ---------------------------------- main -------------------------------------

if __name__ == "__main__":
    key = jax.random.PRNGKey(0)
    k_vec, k_geo, k_van, k_vec2, k_geo2, k_van2 = jax.random.split(key, 6)

    B, V_IN, V_OUT = 4, 8, 16
    vec = jax.random.normal(k_vec, (B, V_IN, 3), dtype=jnp.float32)
    # The kernels cast activations/weights to bf16 for the MXU (f32 accumulate);
    # the references mirror that rounding so comparisons stay tight.
    vec_q = vec.astype(jnp.bfloat16).astype(jnp.float32)

    # --- geometric, num_vec_in != num_vec_out (glorot weight) ---
    geo = VecLinearPallas(V_IN, V_OUT, "geometric", k_geo)
    out_geo = jax.block_until_ready(geo(vec))
    ref_geo = jnp.einsum("bid,oi->bod", vec_q, geo.W.astype(jnp.float32))
    assert out_geo.shape == (B, V_OUT, 3)
    assert jnp.allclose(out_geo, ref_geo, atol=1e-4, rtol=1e-4)

    # --- vanilla, num_vec_in != num_vec_out (glorot weight) ---
    van = VecLinearPallas(V_IN, V_OUT, "vanilla", k_van)
    out_van = jax.block_until_ready(van(vec))
    ref_van = jnp.einsum("bk,ok->bo", vec_q.reshape(B, V_IN * 3),
                         van.W.astype(jnp.float32)).reshape(B, V_OUT, 3)
    assert out_van.shape == (B, V_OUT, 3)
    assert jnp.allclose(out_van, ref_van, atol=1e-4, rtol=1e-4)

    # --- vanilla, num_vec_in == num_vec_out ('final' zero init + residual) ---
    van_res = VecLinearPallas(V_IN, V_IN, "vanilla", k_van)
    out_vr = jax.block_until_ready(van_res(vec))
    assert out_vr.shape == (B, V_IN, 3)
    assert jnp.allclose(out_vr, vec, atol=1e-6)   # zero weight -> identity

    # --- geometric, num_vec_in == num_vec_out (residual path) ---
    geo_res = VecLinearPallas(V_IN, V_IN, "geometric", k_geo)
    out_gr = jax.block_until_ready(geo_res(vec))
    assert out_gr.shape == (B, V_IN, 3)
    assert jnp.allclose(out_gr, vec, atol=1e-6)   # zero weight -> identity

    # --- larger shapes: exercise the lane-tiled grid (incl. a partial block) ---
    B2, V_IN2, V_OUT2 = 180, 32, 64                 # B2*3 = 540 -> 2 lane tiles
    vec2 = jax.random.normal(k_vec2, (B2, V_IN2, 3), dtype=jnp.float32)
    vec2_q = vec2.astype(jnp.bfloat16).astype(jnp.float32)

    geo2 = VecLinearPallas(V_IN2, V_OUT2, "geometric", k_geo2)
    out_geo2 = jax.block_until_ready(geo2(vec2))
    ref_geo2 = jnp.einsum("bid,oi->bod", vec2_q, geo2.W.astype(jnp.float32))
    assert out_geo2.shape == (B2, V_OUT2, 3)
    assert jnp.allclose(out_geo2, ref_geo2, atol=2e-4, rtol=2e-4)

    B3 = 300                                        # 300 rows -> 2 row tiles
    vec3 = jax.random.normal(k_van2, (B3, V_IN2, 3), dtype=jnp.float32)
    vec3_q = vec3.astype(jnp.bfloat16).astype(jnp.float32)
    van2 = VecLinearPallas(V_IN2, V_OUT2, "vanilla", k_van2)
    out_van2 = jax.block_until_ready(van2(vec3))
    ref_van2 = jnp.einsum("bk,ok->bo", vec3_q.reshape(B3, V_IN2 * 3),
                          van2.W.astype(jnp.float32)).reshape(B3, V_OUT2, 3)
    assert out_van2.shape == (B3, V_OUT2, 3)
    assert jnp.allclose(out_van2, ref_van2, atol=2e-4, rtol=2e-4)

    print("KERNEL_OK")
</pallas_src>

<mosaic_0001>
module attributes {stable_mosaic.version = 11 : i64} {
  func.func @_wx_kernel(%arg0: i32, %arg1: memref<8x12xf32, #tpu.memory_space<vmem>>, %arg2: memref<16x8xbf16, #tpu.memory_space<vmem>>, %arg3: memref<16x12xf32, #tpu.memory_space<vmem>>) attributes {dimension_semantics = [#tpu.dimension_semantics<parallel>], iteration_bounds = array<i64: 1>, scalar_prefetch = 0 : i64, scratch_operands = 0 : i64, tpu.core_type = #tpu.core_type<tc>, window_params = [{transform_indices = @transform_0, window_bounds = array<i64: 8, 12>}, {pipeline_mode = #tpu.pipeline_mode<synchronous>, transform_indices = @transform_1, window_bounds = array<i64: 16, 8>}, {transform_indices = @transform_2, window_bounds = array<i64: 16, 12>}]} {
    %c0 = arith.constant 0 : index
    %c0_0 = arith.constant 0 : index
    %0 = vector.load %arg2[%c0, %c0_0] : memref<16x8xbf16, #tpu.memory_space<vmem>>, vector<16x8xbf16>
    %c0_1 = arith.constant 0 : index
    %c0_2 = arith.constant 0 : index
    %1 = vector.load %arg1[%c0_1, %c0_2] : memref<8x12xf32, #tpu.memory_space<vmem>>, vector<8x12xf32>
    %2 = arith.truncf %1 : vector<8x12xf32> to vector<8x12xbf16>
    %cst = arith.constant dense<0.000000e+00> : vector<16x12xf32>
    %3 = tpu.matmul %0, %2, %cst {dimension_numbers = #tpu.dot_dimension_numbers<[1], [0], [0], [1], [0, 0, 1, 1], [], []>} : vector<16x8xbf16>, vector<8x12xbf16>, vector<16x12xf32> -> vector<16x12xf32>
    %c0_3 = arith.constant 0 : index
    %c0_4 = arith.constant 0 : index
    %4 = vector.load %arg3[%c0_3, %c0_4] : memref<16x12xf32, #tpu.memory_space<vmem>>, vector<16x12xf32>
    tpu.vector_store %arg3[%c0_3, %c0_4], %3 {strides = array<i32>} : memref<16x12xf32, #tpu.memory_space<vmem>>, vector<16x12xf32>,
    return
  }
  func.func @transform_0(%arg0: i32) -> (i32, i32) {
    %c0_i32 = arith.constant 0 : i32
    %c0_i32_0 = arith.constant 0 : i32
    return %c0_i32, %arg0 : i32, i32
  }
  func.func @transform_1(%arg0: i32) -> (i32, i32) {
    %c0_i32 = arith.constant 0 : i32
    %c0_i32_0 = arith.constant 0 : i32
    %c0_i32_1 = arith.constant 0 : i32
    return %c0_i32, %c0_i32_0 : i32, i32
  }
  func.func @transform_2(%arg0: i32) -> (i32, i32) {
    %c0_i32 = arith.constant 0 : i32
    %c0_i32_0 = arith.constant 0 : i32
    return %c0_i32, %arg0 : i32, i32
  }
}

</mosaic_0001>

<llo_original>
// kernel: tpu_custom_call.1
$region0: #{tpu_custom_call.1}
  #allocation0 [shape = 'u32[]', space=smem, size = 0x4, offset = 0x4, fixed_abs, tag = 'smem constant byte address 0x4 - core index']
  #allocation1 [shape = 'u32[144,128]{1,0:T(1,128)}', space=vmem, size = 0x12000, scoped, tag = 'internal scratch']
  %s0 = inlined_call_operand.vmem [shape: f32[8,12], index: 0, kind: input, shape index: {}]
  %s1 = inlined_call_operand.vmem [shape: bf16[16,8], index: 1, kind: input, shape index: {}]
  %s2 = inlined_call_operand.hbm [shape: f32[16,12], index: 2, kind: output, shape index: {}]
  %s3 = sld [smem:[#allocation0]]
  $region18: #{tpu_custom_call.1} parent=0
    _
  %s5 = ssub.s32 1, %s3
  %s6 = scalar_select 0, %s5, %s3
  $region1: #{tpu_custom_call.1} parent=0
    #allocation2 [shape = 'u8[8192]{0}', space=vmem, size = 0x2000, scoped, tag = 'output window, operand 0, single buffered']
    #allocation3 [shape = 's32[1]{0}', space=sflag, size = 0x4, scoped, tag = 'scoped memory for tpu_custom_call.1']
    %7 = vsyncpa [#allocation3], 0
    // Predicated region
    $region2: #{tpu_custom_call.1} parent=1 // pred_check
      _
    $region3: #{tpu_custom_call.1} parent=1 // pred_check_branch
      %9 = sbr.rel (0) target = $region5
    $region4: #{tpu_custom_call.1} parent=1 // pred_region
      _
    $region5: #{tpu_custom_call.1} parent=1 // pred_fallthru
      _
    // Predicated region
    $region6: #{tpu_custom_call.1} parent=1 // pred_check
      _
    $region7: #{tpu_custom_call.1} parent=1 // pred_check_branch
      %11 = sbr.rel (0) target = $region9
    $region8: #{tpu_custom_call.1} parent=1 // pred_region
      _
    $region9: #{tpu_custom_call.1} parent=1 // pred_fallthru
      _
    %v13 = vld [vmem:[%s1] sm:$0xf]
    %v14 = vld [vmem:[%s1 + $0x4] sm:$0xf]
    %v15 = vld [vmem:[%s0] sm:$0xff]
    %v16 = vpack.c.bf16 %v15, %v15
    %v19 = vunpack.c.l.b16 %v13
    %v20 = vunpack.c.l.b16 %v14
    %v21 = vpack.c.b16 %v20, %v19
    %vm22 = vcmask 64512
    %v24 = vsel %vm22, %v21, 0
    %vm26 = vcmask 1043456
    %v28 = vsel %vm26, %v16, 0
    %30 = vmatprep.subr.bf16.mxu0 0
    %31 = vmatpush1.bf16.msra.mxu0 %v28
    %32 = vmatprep.subr.bf16.mxu0 0
    %33 = vmatpush1.bf16.msra.mxu0 0
    %34 = vmatprep.subr.bf16.mxu0 0
    %35 = vmatpush1.bf16.msra.mxu0 0
    %36 = vmatprep.subr.bf16.mxu0 0
    %37 = vmatpush1.bf16.msra.mxu0 0
    %38 = vmatprep.subr.bf16.mxu0 0
    %39 = vmatpush1.bf16.msra.mxu0 0
    %40 = vmatprep.subr.bf16.mxu0 0
    %41 = vmatpush1.bf16.msra.mxu0 0
    %42 = vmatprep.subr.bf16.mxu0 0
    %43 = vmatpush1.bf16.msra.mxu0 0
    %44 = vmatprep.subr.bf16.mxu0 0
    %45 = vmatpush1.bf16.msra.mxu0 0
    %46 = vmatprep.subr.bf16.mxu0 0
    %47 = vmatpush1.bf16.msra.mxu0 0
    %48 = vmatprep.subr.bf16.mxu0 0
    %49 = vmatpush1.bf16.msra.mxu0 0
    %50 = vmatprep.subr.bf16.mxu0 0
    %51 = vmatpush1.bf16.msra.mxu0 0
    %52 = vmatprep.subr.bf16.mxu0 0
    %53 = vmatpush1.bf16.msra.mxu0 0
    %54 = vmatprep.subr.bf16.mxu0 0
    %55 = vmatpush1.bf16.msra.mxu0 0
    %56 = vmatprep.subr.bf16.mxu0 0
    %57 = vmatpush1.bf16.msra.mxu0 0
    %58 = vmatprep.subr.bf16.mxu0 0
    %59 = vmatpush1.bf16.msra.mxu0 0
    %60 = vmatprep.subr.bf16.mxu0 0
    %61 = vmatpush1.bf16.msra.mxu0 0
    %62 = vmatprep.mubr.bf16.mxu0 0
    %63 = vmatmul.mubr.bf16.gmra.mrb[0].mxu0 %v24
    %v64 = vpop.f32.mrb[0].mxu0
    %v65 = vadd.f32 0.0, %v64
    %v66 = vpop.f32.mrb[0].mxu0
    %v67 = vpop.f32.mrb[0].mxu0
    %v68 = vadd.f32 0.0, %v67
    %v69 = vpop.f32.mrb[0].mxu0
    %70 = vdwg.mxu0
    %vm71 = vcmask 97280
    %72 = vst.msk [vmem:[#allocation2] sm:$0xff] %vm71, %v65
    %73 = vst.msk [vmem:[#allocation2 + $0x8] sm:$0xff] %vm71, %v68
    // Predicated region
    $region10: #{tpu_custom_call.1} parent=1 // pred_check
      _
    $region11: #{tpu_custom_call.1} parent=1 // pred_check_branch
      %75 = sbr.rel (0) target = $region13
    $region12: #{tpu_custom_call.1} parent=1 // pred_region
      %s77 = ssub.s32 256, 256
      %78 = vsyncadd [#allocation3], %s77
      %s79 = sshll.u32 [#allocation2], 4
      %s80 = int_to_ptr.vmem [resolvable:$true] %s79
      %85 = dma.vmem_to_hbm [thread:$0]  %s80, 256, %s2, [#allocation3], 128, 128, 8
    $region13: #{tpu_custom_call.1} parent=1 // pred_fallthru
      _
    // Predicated region
    $region14: #{tpu_custom_call.1} parent=1 // pred_check
      _
    $region15: #{tpu_custom_call.1} parent=1 // pred_check_branch
      %87 = sbr.rel (0) target = $region17
    $region16: #{tpu_custom_call.1} parent=1 // pred_region
      %88 = dma.done [#allocation3], 256
    $region17: #{tpu_custom_call.1} parent=1 // pred_fallthru
      _
    %89 = vsyncpa [#allocation3], 1

</llo_original>
